<compile_context>
chip_gen: v5e
topology: v5e:2x2
jax: 0.10.0
libtpu: 0.0.40
codegen_flags: <defaults>
</compile_context>

<pallas_src>
import jax
import jax.numpy as jnp
from jax.experimental import pallas as pl
from jax.experimental.pallas import tpu as pltpu

_TARGET_BLOCK_BYTES = 4 * 1024 * 1024   # ~4 MiB per block (per perf review)
_VMEM_LIMIT_BYTES = 32 << 20            # 4 MiB x 4 live buffers = 16 MiB + headroom


def _mish_kernel(x_ref, o_ref):
    x = x_ref[...].astype(jnp.float32)
    # tanh(log1p(t)) == t*(t+2) / (t*(t+2) + 2), t = exp(x)  (exact identity):
    # one transcendental (exp) instead of exp + log1p + tanh.
    # min(x, 20) guards exp from overflow; at x == 20, u/(u+2) rounds to 1.0f,
    # so the output is x for x >= 20, matching PyTorch's softplus threshold.
    # The ratio is formed before multiplying by x so huge |x| stays finite.
    t = jnp.exp(jnp.minimum(x, 20.0))
    u = t * (t + 2.0)
    r = u * pl.reciprocal(u + 2.0, approx=False)   # tanh(softplus(x)) in [0, 1]
    o_ref[...] = (x * r).astype(o_ref.dtype)


def _round_up(v, m):
    return ((v + m - 1) // m) * m


def _pick_lane(n):
    # Largest lane width that divides n -> reshape is a free metadata change.
    for lane in (1024, 512, 256, 128):
        if n % lane == 0:
            return lane
    return None


def _mish_2d(x2d, *, donate=False):
    rows, lane = x2d.shape
    itemsize = jnp.dtype(x2d.dtype).itemsize
    n = rows * lane

    # Byte-budgeted block rows (~4 MiB), 8-aligned.
    tr_budget = max(8, (_TARGET_BLOCK_BYTES // (lane * itemsize)) // 8 * 8)
    if rows <= 8:
        tr = rows                              # full extent (allowed even if <8)
    else:
        # Keep at least 2 grid steps so both v7x TensorCores get work.
        half = _round_up(pl.cdiv(rows, 2), 8)
        tr = max(8, min(tr_budget, half))
    grid = (pl.cdiv(rows, tr),)

    cost = pl.CostEstimate(
        flops=6 * n,
        transcendentals=2 * n,
        bytes_accessed=2 * n * itemsize,
    )

    return pl.pallas_call(
        _mish_kernel,
        out_shape=jax.ShapeDtypeStruct((rows, lane), x2d.dtype),
        grid_spec=pltpu.PrefetchScalarGridSpec(
            num_scalar_prefetch=0,
            grid=grid,
            in_specs=[pl.BlockSpec((tr, lane), lambda i: (i, 0))],
            out_specs=pl.BlockSpec((tr, lane), lambda i: (i, 0)),
        ),
        compiler_params=pltpu.CompilerParams(
            dimension_semantics=("parallel",),
            vmem_limit_bytes=_VMEM_LIMIT_BYTES,
        ),
        cost_estimate=cost,
        input_output_aliases=({0: 0} if donate else {}),
    )(x2d)


def _mish_jnp(x):
    # Same rational form, used only for tiny ragged tails (< lane elements).
    xf = x.astype(jnp.float32)
    t = jnp.exp(jnp.minimum(xf, 20.0))
    u = t * (t + 2.0)
    return (xf * (u / (u + 2.0))).astype(x.dtype)


def mish(x, *, donate=False):
    """Elementwise Mish: x * tanh(softplus(x)). Works on any shape/dtype."""
    orig_shape = x.shape
    n = x.size
    if n == 0:
        return x

    lane = _pick_lane(n)
    if lane is not None:
        # Aligned path: free reshape, no pad/slice copies.
        x2d = jnp.reshape(x, (n // lane, lane))
        return jnp.reshape(_mish_2d(x2d, donate=donate), orig_shape)

    # Ragged path (n not a multiple of 128): kernel on the aligned bulk, tiny
    # tail in plain jnp; a single concat replaces the old pad + slice copies.
    x_flat = jnp.reshape(x, (-1,))
    lane = 512 if n >= 512 else 128
    n_bulk = (n // lane) * lane
    if n_bulk == 0:
        return jnp.reshape(_mish_jnp(x_flat), orig_shape)
    bulk = _mish_2d(jnp.reshape(x_flat[:n_bulk], (n_bulk // lane, lane)))
    tail = _mish_jnp(x_flat[n_bulk:])
    out = jnp.concatenate([jnp.reshape(bulk, (-1,)), tail])
    return jnp.reshape(out, orig_shape)


def _mish_ref(x):
    xf = x.astype(jnp.float32)
    sp = jnp.where(xf > 20.0, xf, jnp.log1p(jnp.exp(jnp.minimum(xf, 20.0))))
    return (xf * jnp.tanh(sp)).astype(x.dtype)


if __name__ == "__main__":
    key = jax.random.PRNGKey(0)

    # Primary case: NCHW conv activation, matching the module's typical use.
    x = jax.random.normal(key, (2, 4, 16, 16), dtype=jnp.float32) * 3.0
    y = mish(x)
    jax.block_until_ready(y)
    y_ref = _mish_ref(x)
    assert y.shape == x.shape and y.dtype == x.dtype
    assert jnp.allclose(y, y_ref, atol=1e-5, rtol=1e-5)

    # Multi-step grid path (rows > 8 -> >= 2 grid steps).
    k1, k2 = jax.random.split(key)
    x2 = jax.random.normal(k1, (4, 8, 32, 32), dtype=jnp.float32) * 4.0
    y2 = mish(x2)
    jax.block_until_ready(y2)
    assert jnp.allclose(y2, _mish_ref(x2), atol=1e-5, rtol=1e-5)

    # Ragged path (size not a multiple of 128).
    x3 = jax.random.normal(k2, (2, 3, 67), dtype=jnp.float32) * 3.0
    y3 = mish(x3)
    jax.block_until_ready(y3)
    assert jnp.allclose(y3, _mish_ref(x3), atol=1e-5, rtol=1e-5)

    print("KERNEL_OK")
</pallas_src>

<mosaic_0001>
module attributes {stable_mosaic.version = 11 : i64} {
  func.func @_mish_kernel(%arg0: i32, %arg1: memref<2x1024xf32, #tpu.memory_space<vmem>>, %arg2: memref<2x1024xf32, #tpu.memory_space<vmem>>) attributes {dimension_semantics = [#tpu.dimension_semantics<parallel>], iteration_bounds = array<i64: 1>, scalar_prefetch = 0 : i64, scratch_operands = 0 : i64, tpu.core_type = #tpu.core_type<tc>, window_params = [{transform_indices = @transform_0, window_bounds = array<i64: 2, 1024>}, {transform_indices = @transform_1, window_bounds = array<i64: 2, 1024>}]} {
    %c0 = arith.constant 0 : index
    %c0_0 = arith.constant 0 : index
    %0 = vector.load %arg1[%c0, %c0_0] : memref<2x1024xf32, #tpu.memory_space<vmem>>, vector<2x1024xf32>
    %cst = arith.constant 2.000000e+01 : f32
    %1 = vector.broadcast %cst : f32 to vector<2x1024xf32>
    %2 = arith.minimumf %0, %1 : vector<2x1024xf32>
    %3 = math.exp %2 : vector<2x1024xf32>
    %cst_1 = arith.constant 2.000000e+00 : f32
    %4 = vector.broadcast %cst_1 : f32 to vector<2x1024xf32>
    %5 = arith.addf %3, %4 : vector<2x1024xf32>
    %6 = arith.mulf %3, %5 : vector<2x1024xf32>
    %cst_2 = arith.constant 2.000000e+00 : f32
    %7 = vector.broadcast %cst_2 : f32 to vector<2x1024xf32>
    %8 = arith.addf %6, %7 : vector<2x1024xf32>
    %9 = tpu.reciprocal %8 : vector<2x1024xf32> -> vector<2x1024xf32>
    %10 = arith.mulf %6, %9 : vector<2x1024xf32>
    %11 = arith.mulf %0, %10 : vector<2x1024xf32>
    %c0_3 = arith.constant 0 : index
    %c0_4 = arith.constant 0 : index
    %12 = vector.load %arg2[%c0_3, %c0_4] : memref<2x1024xf32, #tpu.memory_space<vmem>>, vector<2x1024xf32>
    tpu.vector_store %arg2[%c0_3, %c0_4], %11 {strides = array<i32>} : memref<2x1024xf32, #tpu.memory_space<vmem>>, vector<2x1024xf32>,
    return
  }
  func.func @transform_0(%arg0: i32) -> (i32, i32) {
    %c0_i32 = arith.constant 0 : i32
    %c0_i32_0 = arith.constant 0 : i32
    return %arg0, %c0_i32 : i32, i32
  }
  func.func @transform_1(%arg0: i32) -> (i32, i32) {
    %c0_i32 = arith.constant 0 : i32
    %c0_i32_0 = arith.constant 0 : i32
    return %arg0, %c0_i32 : i32, i32
  }
}

</mosaic_0001>

<llo_original>
// kernel: tpu_custom_call.1
$region0: #{tpu_custom_call.1}
  #allocation0 [shape = 'u32[]', space=smem, size = 0x4, offset = 0x4, fixed_abs, tag = 'smem constant byte address 0x4 - core index']
  #allocation1 [shape = 'u32[72,128]{1,0:T(1,128)}', space=vmem, size = 0x9000, scoped, tag = 'internal scratch']
  %s0 = inlined_call_operand.hbm [shape: f32[2,1024], index: 0, kind: input, shape index: {}]
  %s1 = inlined_call_operand.hbm [shape: f32[2,1024], index: 1, kind: output, shape index: {}]
  %s2 = sld [smem:[#allocation0]]
  $region18: #{tpu_custom_call.1} parent=0
    _
  %s4 = ssub.s32 1, %s2
  %s5 = scalar_select 0, %s4, %s2
  $region1: #{tpu_custom_call.1} parent=0
    #allocation2 [shape = 'u8[8192]{0}', space=vmem, size = 0x2000, scoped, tag = 'input window, operand 0, single buffered']
    #allocation3 [shape = 's32[1]{0}', space=sflag, size = 0x4, scoped, tag = 'scoped memory for tpu_custom_call.1']
    #allocation4 [shape = 's32[1]{0}', space=sflag, size = 0x4, scoped, tag = 'scoped memory for tpu_custom_call.1']
    #allocation5 [shape = 'u8[8192]{0}', space=vmem, size = 0x2000, scoped, tag = 'output window, operand 0, single buffered']
    %6 = vsyncpa [#allocation3], 0
    %7 = vsyncpa [#allocation4], 0
    // Predicated region
    $region2: #{tpu_custom_call.1} parent=1 // pred_check
      _
    $region3: #{tpu_custom_call.1} parent=1 // pred_check_branch
      %9 = sbr.rel (0) target = $region5
    $region4: #{tpu_custom_call.1} parent=1 // pred_region
      %11 = vsyncadd [#allocation3], 0
      %s13 = sshll.u32 %s0, 4
      %s14 = int_to_ptr.hbm [resolvable:$true] %s13
      %s15 = sshll.u32 [#allocation2], 4
      %s16 = int_to_ptr.vmem [resolvable:$true] %s15
      %18 = dma.hbm_to_vmem [thread:$0]  %s14, 256, %s16, [#allocation3]
    $region5: #{tpu_custom_call.1} parent=1 // pred_fallthru
      _
    // Predicated region
    $region6: #{tpu_custom_call.1} parent=1 // pred_check
      _
    $region7: #{tpu_custom_call.1} parent=1 // pred_check_branch
      %20 = sbr.rel (0) target = $region9
    $region8: #{tpu_custom_call.1} parent=1 // pred_region
      %22 = dma.done [#allocation3], 256
    $region9: #{tpu_custom_call.1} parent=1 // pred_fallthru
      _
    %v23 = vld [vmem:[#allocation2] sm:$0xff]
    %v24 = vld [vmem:[#allocation2 + $0x8] sm:$0xff]
    %v25 = vmin.f32 %v23, 20.0
    %v26 = vmin.f32 %v24, 20.0
    %v27 = vmul.f32 %v25, 1.442695
    %v28 = vpow.pop %v27
    %v29 = vmul.f32 %v26, 1.442695
    %v30 = vpow.pop %v29
    %v31 = vadd.f32 %v28, 2.0
    %v32 = vadd.f32 %v30, 2.0
    %v33 = vmul.f32 %v28, %v31
    %v34 = vmul.f32 %v30, %v32
    %v35 = vadd.f32 %v33, 2.0
    %v36 = vadd.f32 %v34, 2.0
    %v37 = vrcp.pop %v35
    %v38 = vmul.f32 %v35, %v37
    %v39 = vsub.f32 1.0, %v38
    %v40 = vmul.f32 %v37, %v39
    %v41 = vadd.f32 %v37, %v40
    %vm42 = vweird.f32 %v35
    %vm43 = vweird.f32 %v37
    %vm44 = vmor %vm42, %vm43
    %v45 = vsel %vm44, %v37, %v41
    %v46 = vand.u32 2147483647, %v35
    %vm47 = vcmp.eq.f32.partialorder %v46, 8.507059e+37
    %v48 = vand.u32 %v35, 2147483648
    %v49 = vor.u32 1.1754944e-38, %v48
    %v50 = vsel %vm47, %v49, %v45
    %v51 = vrcp.pop %v36
    %v52 = vmul.f32 %v36, %v51
    %v53 = vsub.f32 1.0, %v52
    %v54 = vmul.f32 %v51, %v53
    %v55 = vadd.f32 %v51, %v54
    %vm56 = vweird.f32 %v36
    %vm57 = vweird.f32 %v51
    %vm58 = vmor %vm56, %vm57
    %v59 = vsel %vm58, %v51, %v55
    %v60 = vand.u32 2147483647, %v36
    %vm61 = vcmp.eq.f32.partialorder %v60, 8.507059e+37
    %v62 = vand.u32 %v36, 2147483648
    %v63 = vor.u32 1.1754944e-38, %v62
    %v64 = vsel %vm61, %v63, %v59
    %v65 = vmul.f32 %v33, %v50
    %v66 = vmul.f32 %v34, %v64
    %v67 = vmul.f32 %v23, %v65
    %v68 = vmul.f32 %v24, %v66
    %69 = vst [vmem:[#allocation5] sm:$0xff] %v67
    %70 = vst [vmem:[#allocation5 + $0x8] sm:$0xff] %v68
    // Predicated region
    $region10: #{tpu_custom_call.1} parent=1 // pred_check
      _
    $region11: #{tpu_custom_call.1} parent=1 // pred_check_branch
      %72 = sbr.rel (0) target = $region13
    $region12: #{tpu_custom_call.1} parent=1 // pred_region
      %74 = vsyncadd [#allocation4], 0
      %s76 = sshll.u32 [#allocation5], 4
      %s77 = int_to_ptr.vmem [resolvable:$true] %s76
      %s78 = sshll.u32 %s1, 4
      %s79 = int_to_ptr.hbm [resolvable:$true] %s78
      %81 = dma.vmem_to_hbm [thread:$0]  %s77, 256, %s79, [#allocation4]
    $region13: #{tpu_custom_call.1} parent=1 // pred_fallthru
      _
    // Predicated region
    $region14: #{tpu_custom_call.1} parent=1 // pred_check
      _
    $region15: #{tpu_custom_call.1} parent=1 // pred_check_branch
      %83 = sbr.rel (0) target = $region17
    $region16: #{tpu_custom_call.1} parent=1 // pred_region
      %85 = dma.done [#allocation4], 256
    $region17: #{tpu_custom_call.1} parent=1 // pred_fallthru
      _
    %86 = vsyncpa [#allocation3], 1
    %87 = vsyncpa [#allocation4], 1

</llo_original>
